<compile_context>
chip_gen: v7x
topology: tpu7x:2x2x1
jax: 0.10.0
libtpu: 0.0.40
codegen_flags: <defaults>
</compile_context>

<pallas_src>
import math

import jax
import jax.numpy as jnp
from jax.experimental import pallas as pl
from jax.experimental.pallas import tpu as pltpu


def _pwconv_bn_kernel(x_ref, w_ref, b_ref, o_ref):
    # x_ref: (TILE_R, K), w_ref: (K, K), b_ref: (1, K), o_ref: (TILE_R, K)
    acc = jnp.dot(x_ref[...], w_ref[...], preferred_element_type=jnp.float32)
    acc = acc + b_ref[...].astype(jnp.float32)
    o_ref[...] = acc.astype(o_ref.dtype)


def _fused_rowwise_linear(x_rows, w, b, *, tile_rows=512):
    """x_rows: (R, K); w: (K, K); b: (K,).  Returns (R, K) = x_rows @ w + b."""
    R, K = x_rows.shape
    assert w.shape == (K, K) and b.shape == (K,)
    tile_rows = min(tile_rows, R)
    if tile_rows < R:
        tile_rows = max(8, (tile_rows // 8) * 8)   # keep (8,128)-compatible tiles
    grid = (pl.cdiv(R, tile_rows),)                # ragged last tile is masked
    return pl.pallas_call(
        _pwconv_bn_kernel,
        out_shape=jax.ShapeDtypeStruct((R, K), x_rows.dtype),
        grid_spec=pltpu.PrefetchScalarGridSpec(
            num_scalar_prefetch=0,
            grid=grid,
            in_specs=[
                pl.BlockSpec((tile_rows, K), lambda i: (i, 0)),  # token rows
                pl.BlockSpec((K, K), lambda i: (0, 0)),          # resident weight
                pl.BlockSpec((1, K), lambda i: (0, 0)),          # resident bias
            ],
            out_specs=pl.BlockSpec((tile_rows, K), lambda i: (i, 0)),
        ),
        compiler_params=pltpu.CompilerParams(
            dimension_semantics=("parallel",),   # megacore / v7x 2-TC split
        ),
    )(x_rows, w, b.reshape(1, K))


def _pack_factor(c, total_tokens, max_packed_width=768):
    """Smallest r with (r*c) % 128 == 0, r | total_tokens, r*c <= cap; else 1."""
    if c % 128 == 0:
        return 1
    r = math.lcm(c, 128) // c
    if r * c <= max_packed_width and total_tokens % r == 0:
        return r
    return 1


class CustomPWConvPallas:
    """JAX/Pallas re-implementation of CustomPWConv (1x1 conv + BN, token I/O)."""

    def __init__(self, dim, key, eps=1e-5):
        self.dim = dim
        self.eps = eps
        kw, kb = jax.random.split(key)
        # Conv2d(dim, dim, 1) weight with kaiming_normal_(fan_in, relu):
        #   std = sqrt(2 / fan_in), fan_in = dim * 1 * 1
        std = math.sqrt(2.0 / dim)
        self.w_conv = std * jax.random.normal(kw, (dim, dim), jnp.float32)  # (out, in)
        # Conv2d default bias init: U(-1/sqrt(fan_in), 1/sqrt(fan_in))
        bound = 1.0 / math.sqrt(dim)
        self.b_conv = jax.random.uniform(kb, (dim,), jnp.float32, -bound, bound)
        # BatchNorm2d parameters / running statistics (inference mode).
        self.gamma = jnp.ones((dim,), jnp.float32)
        self.beta = jnp.zeros((dim,), jnp.float32)
        self.running_mean = jnp.zeros((dim,), jnp.float32)
        self.running_var = jnp.ones((dim,), jnp.float32)

    def __call__(self, x, H, W, *, tile_rows=512):
        # x: (B, N, C), N == H * W, C == self.dim
        B, N, C = x.shape
        assert N == H * W and C == self.dim
        # Fold inference-mode BN into the 1x1 conv:  out = x @ W_eff + b_eff
        s = self.gamma / jnp.sqrt(self.running_var + self.eps)          # (C,)
        w_eff = (self.w_conv * s[:, None]).T.astype(x.dtype)            # (C_in, C_out)
        b_eff = self.b_conv * s + (self.beta - self.running_mean * s)   # (C,)

        r = _pack_factor(C, B * N)
        if r > 1:
            # Pack r consecutive tokens per row (free contiguous reshape) and use
            # a block-diagonal weight so lanes are fully dense (r*C >= 128).
            w_pack = jnp.kron(jnp.eye(r, dtype=w_eff.dtype), w_eff)     # (r*C, r*C)
            b_pack = jnp.tile(b_eff, r)                                 # (r*C,)
            x_rows = x.reshape(B * N // r, r * C)
            y = _fused_rowwise_linear(x_rows, w_pack, b_pack, tile_rows=tile_rows)
        else:
            x_rows = x.reshape(B * N, C)
            y = _fused_rowwise_linear(x_rows, w_eff, b_eff, tile_rows=tile_rows)
        return y.reshape(B, N, C)


def _reference(x, w_conv, b_conv, gamma, beta, mean, var, eps):
    """Pure-JAX reference of CustomPWConv.forward (BN in inference mode)."""
    y = jnp.einsum("bnc,oc->bno", x, w_conv) + b_conv          # 1x1 conv over channels
    y = (y - mean) * (gamma / jnp.sqrt(var + eps)) + beta      # BatchNorm2d (eval)
    return y


if __name__ == "__main__":
    key = jax.random.PRNGKey(0)
    dim = 32
    B, H, W = 2, 16, 16
    N = H * W

    k_x, k_init, k_bn, k_x2 = jax.random.split(key, 4)
    x = jax.random.normal(k_x, (B, N, dim), jnp.float32)

    model = CustomPWConvPallas(dim, k_init)
    # Non-trivial BN statistics (as if loaded from a trained checkpoint) so the
    # BN-folding path is actually exercised.
    kg, kb_, km, kv = jax.random.split(k_bn, 4)
    model.gamma = 1.0 + 0.1 * jax.random.normal(kg, (dim,), jnp.float32)
    model.beta = 0.1 * jax.random.normal(kb_, (dim,), jnp.float32)
    model.running_mean = 0.1 * jax.random.normal(km, (dim,), jnp.float32)
    model.running_var = 1.0 + 0.1 * jax.random.uniform(kv, (dim,), jnp.float32)

    out = model(x, H, W)
    out = jax.block_until_ready(out)
    ref = _reference(x, model.w_conv, model.b_conv, model.gamma, model.beta,
                     model.running_mean, model.running_var, model.eps)
    assert out.shape == (B, N, dim), out.shape
    assert jnp.allclose(out, ref, atol=1e-4, rtol=1e-4), \
        float(jnp.max(jnp.abs(out - ref)))

    # Second config: multiple row tiles + ragged final tile (cdiv grid path).
    H2 = W2 = 24
    x2 = jax.random.normal(k_x2, (1, H2 * W2, dim), jnp.float32)
    out2 = jax.block_until_ready(model(x2, H2, W2, tile_rows=128))
    ref2 = _reference(x2, model.w_conv, model.b_conv, model.gamma, model.beta,
                      model.running_mean, model.running_var, model.eps)
    assert out2.shape == (1, H2 * W2, dim), out2.shape
    assert jnp.allclose(out2, ref2, atol=1e-4, rtol=1e-4), \
        float(jnp.max(jnp.abs(out2 - ref2)))

    print("KERNEL_OK")
</pallas_src>

<mosaic_0001>
module attributes {stable_mosaic.version = 11 : i64} {
  func.func @_pwconv_bn_kernel(%arg0: i32, %arg1: memref<128x128xf32, #tpu.memory_space<vmem>>, %arg2: memref<128x128xf32, #tpu.memory_space<vmem>>, %arg3: memref<1x128xf32, #tpu.memory_space<vmem>>, %arg4: memref<128x128xf32, #tpu.memory_space<vmem>>) attributes {dimension_semantics = [#tpu.dimension_semantics<parallel>], iteration_bounds = array<i64: 1>, scalar_prefetch = 0 : i64, scratch_operands = 0 : i64, tpu.core_type = #tpu.core_type<tc>, window_params = [{transform_indices = @transform_0, window_bounds = array<i64: 128, 128>}, {pipeline_mode = #tpu.pipeline_mode<synchronous>, transform_indices = @transform_1, window_bounds = array<i64: 128, 128>}, {pipeline_mode = #tpu.pipeline_mode<synchronous>, transform_indices = @transform_2, window_bounds = array<i64: 1, 128>}, {transform_indices = @transform_3, window_bounds = array<i64: 128, 128>}]} {
    %c0 = arith.constant 0 : index
    %c0_0 = arith.constant 0 : index
    %0 = vector.load %arg1[%c0, %c0_0] : memref<128x128xf32, #tpu.memory_space<vmem>>, vector<128x128xf32>
    %c0_1 = arith.constant 0 : index
    %c0_2 = arith.constant 0 : index
    %1 = vector.load %arg2[%c0_1, %c0_2] : memref<128x128xf32, #tpu.memory_space<vmem>>, vector<128x128xf32>
    %cst = arith.constant dense<0.000000e+00> : vector<128x128xf32>
    %2 = tpu.matmul %0, %1, %cst {dimension_numbers = #tpu.dot_dimension_numbers<[1], [0], [0], [1], [0, 0, 1, 1], [], []>} : vector<128x128xf32>, vector<128x128xf32>, vector<128x128xf32> -> vector<128x128xf32>
    %c0_3 = arith.constant 0 : index
    %c0_4 = arith.constant 0 : index
    %3 = vector.load %arg3[%c0_3, %c0_4] : memref<1x128xf32, #tpu.memory_space<vmem>>, vector<1x128xf32>
    %4 = vector.broadcast %3 : vector<1x128xf32> to vector<128x128xf32>
    %5 = arith.addf %2, %4 : vector<128x128xf32>
    %c0_5 = arith.constant 0 : index
    %c0_6 = arith.constant 0 : index
    %6 = vector.load %arg4[%c0_5, %c0_6] : memref<128x128xf32, #tpu.memory_space<vmem>>, vector<128x128xf32>
    tpu.vector_store %arg4[%c0_5, %c0_6], %5 {strides = array<i32>} : memref<128x128xf32, #tpu.memory_space<vmem>>, vector<128x128xf32>,
    return
  }
  func.func @transform_0(%arg0: i32) -> (i32, i32) {
    %c0_i32 = arith.constant 0 : i32
    %c0_i32_0 = arith.constant 0 : i32
    return %arg0, %c0_i32 : i32, i32
  }
  func.func @transform_1(%arg0: i32) -> (i32, i32) {
    %c0_i32 = arith.constant 0 : i32
    %c0_i32_0 = arith.constant 0 : i32
    %c0_i32_1 = arith.constant 0 : i32
    return %c0_i32, %c0_i32_0 : i32, i32
  }
  func.func @transform_2(%arg0: i32) -> (i32, i32) {
    %c0_i32 = arith.constant 0 : i32
    %c0_i32_0 = arith.constant 0 : i32
    %c0_i32_1 = arith.constant 0 : i32
    return %c0_i32, %c0_i32_0 : i32, i32
  }
  func.func @transform_3(%arg0: i32) -> (i32, i32) {
    %c0_i32 = arith.constant 0 : i32
    %c0_i32_0 = arith.constant 0 : i32
    return %arg0, %c0_i32 : i32, i32
  }
}

</mosaic_0001>

<llo_original>
// kernel: tpu_custom_call.1
$region0: #{tpu_custom_call.1}
  #allocation0 [shape = 'u32[]', space=smem, size = 0x4, offset = 0x4, fixed_abs, tag = 'smem constant byte address 0x4 - core index']
  #allocation1 [shape = 'u32[144,128]{1,0:T(1,128)}', space=vmem, size = 0x12000, scoped, tag = 'internal scratch']
  %s0 = inlined_call_operand.hbm [shape: f32[128,128], index: 0, kind: input, shape index: {}]
  %s1 = inlined_call_operand.hbm [shape: f32[128,128], index: 1, kind: input, shape index: {}]
  %s2 = inlined_call_operand.vmem [shape: f32[1,128], index: 2, kind: input, shape index: {}]
  %s3 = inlined_call_operand.hbm [shape: f32[128,128], index: 3, kind: output, shape index: {}]
  %s4 = sld [smem:[#allocation0]]
  $region30: #{tpu_custom_call.1} parent=0
    _
  %s6 = ssub.s32 1, %s4
  %s7 = scalar_select 0, %s6, %s4
  $region1: #{tpu_custom_call.1} parent=0
    #allocation2 [shape = 'u8[65536]{0}', space=vmem, size = 0x10000, scoped, tag = 'input window, operand 0, single buffered']
    #allocation3 [shape = 's32[1]{0}', space=sflag, size = 0x4, scoped, tag = 'scoped memory for tpu_custom_call.1']
    #allocation4 [shape = 's32[1]{0}', space=sflag, size = 0x4, scoped, tag = 'scoped memory for tpu_custom_call.1']
    #allocation5 [shape = 'u8[65536]{0}', space=vmem, size = 0x10000, scoped, tag = 'input window, operand 1, single buffered']
    #allocation6 [shape = 's32[1]{0}', space=sflag, size = 0x4, scoped, tag = 'scoped memory for tpu_custom_call.1']
    #allocation7 [shape = 'u8[65536]{0}', space=vmem, size = 0x10000, scoped, tag = 'output window, operand 0, single buffered']
    %8 = vsyncpa [#allocation3], 0
    %9 = vsyncpa [#allocation6], 0
    %10 = vsyncpa [#allocation4], 0
    // Predicated region
    $region2: #{tpu_custom_call.1} parent=1 // pred_check
      _
    $region3: #{tpu_custom_call.1} parent=1 // pred_check_branch
      %12 = sbr.rel (0) target = $region5
    $region4: #{tpu_custom_call.1} parent=1 // pred_region
      %s14 = ssub.s32 2048, 2048
      %15 = vsyncadd [#allocation3], %s14
      %s16 = sshll.u32 [#allocation2], 4
      %s17 = int_to_ptr.vmem [resolvable:$true] %s16
      %22 = dma.hbm_to_vmem [thread:$0]  %s0, 2048, %s17, [#allocation3], 128, 128, 8
    $region5: #{tpu_custom_call.1} parent=1 // pred_fallthru
      _
    // Predicated region
    $region6: #{tpu_custom_call.1} parent=1 // pred_check
      _
    $region7: #{tpu_custom_call.1} parent=1 // pred_check_branch
      %24 = sbr.rel (0) target = $region9
    $region8: #{tpu_custom_call.1} parent=1 // pred_region
      %s26 = ssub.s32 2048, 2048
      %27 = vsyncadd [#allocation6], %s26
      %s28 = sshll.u32 [#allocation5], 4
      %s29 = int_to_ptr.vmem [resolvable:$true] %s28
      %34 = dma.hbm_to_vmem [thread:$0]  %s1, 2048, %s29, [#allocation6], 128, 128, 8
    $region9: #{tpu_custom_call.1} parent=1 // pred_fallthru
      _
    // Predicated region
    $region10: #{tpu_custom_call.1} parent=1 // pred_check
      _
    $region11: #{tpu_custom_call.1} parent=1 // pred_check_branch
      %36 = sbr.rel (0) target = $region13
    $region12: #{tpu_custom_call.1} parent=1 // pred_region
      _
    $region13: #{tpu_custom_call.1} parent=1 // pred_fallthru
      _
    // Predicated region
    $region14: #{tpu_custom_call.1} parent=1 // pred_check
      _
    $region15: #{tpu_custom_call.1} parent=1 // pred_check_branch
      %38 = sbr.rel (0) target = $region17
    $region16: #{tpu_custom_call.1} parent=1 // pred_region
      %39 = dma.done [#allocation3], 2048
    $region17: #{tpu_custom_call.1} parent=1 // pred_fallthru
      _
    // Predicated region
    $region18: #{tpu_custom_call.1} parent=1 // pred_check
      _
    $region19: #{tpu_custom_call.1} parent=1 // pred_check_branch
      %41 = sbr.rel (0) target = $region21
    $region20: #{tpu_custom_call.1} parent=1 // pred_region
      %42 = dma.done [#allocation6], 2048
    $region21: #{tpu_custom_call.1} parent=1 // pred_fallthru
      _
    %v43 = vld [vmem:[#allocation2] sm:$0xff]
    %v44 = vld [vmem:[#allocation2 + $0x8] sm:$0xff]
    %v45 = vld [vmem:[#allocation2 + $0x10] sm:$0xff]
    %v46 = vld [vmem:[#allocation2 + $0x18] sm:$0xff]
    %v47 = vld [vmem:[#allocation2 + $0x20] sm:$0xff]
    %v48 = vld [vmem:[#allocation2 + $0x28] sm:$0xff]
    %v49 = vld [vmem:[#allocation2 + $0x30] sm:$0xff]
    %v50 = vld [vmem:[#allocation2 + $0x38] sm:$0xff]
    %v51 = vld [vmem:[#allocation2 + $0x40] sm:$0xff]
    %v52 = vld [vmem:[#allocation2 + $0x48] sm:$0xff]
    %v53 = vld [vmem:[#allocation2 + $0x50] sm:$0xff]
    %v54 = vld [vmem:[#allocation2 + $0x58] sm:$0xff]
    %v55 = vld [vmem:[#allocation2 + $0x60] sm:$0xff]
    %v56 = vld [vmem:[#allocation2 + $0x68] sm:$0xff]
    %v57 = vld [vmem:[#allocation2 + $0x70] sm:$0xff]
    %v58 = vld [vmem:[#allocation2 + $0x78] sm:$0xff]
    %v59 = vld [vmem:[#allocation5] sm:$0xff]
    %v60 = vld [vmem:[#allocation5 + $0x8] sm:$0xff]
    %v61 = vld [vmem:[#allocation5 + $0x10] sm:$0xff]
    %v62 = vld [vmem:[#allocation5 + $0x18] sm:$0xff]
    %v63 = vld [vmem:[#allocation5 + $0x20] sm:$0xff]
    %v64 = vld [vmem:[#allocation5 + $0x28] sm:$0xff]
    %v65 = vld [vmem:[#allocation5 + $0x30] sm:$0xff]
    %v66 = vld [vmem:[#allocation5 + $0x38] sm:$0xff]
    %v67 = vld [vmem:[#allocation5 + $0x40] sm:$0xff]
    %v68 = vld [vmem:[#allocation5 + $0x48] sm:$0xff]
    %v69 = vld [vmem:[#allocation5 + $0x50] sm:$0xff]
    %v70 = vld [vmem:[#allocation5 + $0x58] sm:$0xff]
    %v71 = vld [vmem:[#allocation5 + $0x60] sm:$0xff]
    %v72 = vld [vmem:[#allocation5 + $0x68] sm:$0xff]
    %v73 = vld [vmem:[#allocation5 + $0x70] sm:$0xff]
    %v74 = vld [vmem:[#allocation5 + $0x78] sm:$0xff]
    %v75 = vld [vmem:[%s2] sm:$0x1]
    %v77 = vlaneseq
    %v78 = vshrl.u32 %v77, 7
    %v79 = vsub.s32 0, %v78
    %v80 = vrot.slane %v75, %v79
    %82 = vmatprep.subr.mxu0 0.0
    %83 = vmatpush1.msra.mxu0 %v59
    %84 = vmatprep.subr.mxu0 0.0
    %85 = vmatpush1.msra.mxu0 %v60
    %86 = vmatprep.subr.mxu0 0.0
    %87 = vmatpush1.msra.mxu0 %v61
    %88 = vmatprep.subr.mxu0 0.0
    %89 = vmatpush1.msra.mxu0 %v62
    %90 = vmatprep.subr.mxu0 0.0
    %91 = vmatpush1.msra.mxu0 %v63
    %92 = vmatprep.subr.mxu0 0.0
    %93 = vmatpush1.msra.mxu0 %v64
    %94 = vmatprep.subr.mxu0 0.0
    %95 = vmatpush1.msra.mxu0 %v65
    %96 = vmatprep.subr.mxu0 0.0
    %97 = vmatpush1.msra.mxu0 %v66
    %98 = vmatprep.subr.mxu0 0.0
    %99 = vmatpush1.msra.mxu0 %v67
    %100 = vmatprep.subr.mxu0 0.0
    %101 = vmatpush1.msra.mxu0 %v68
    %102 = vmatprep.subr.mxu0 0.0
    %103 = vmatpush1.msra.mxu0 %v69
    %104 = vmatprep.subr.mxu0 0.0
    %105 = vmatpush1.msra.mxu0 %v70
    %106 = vmatprep.subr.mxu0 0.0
    %107 = vmatpush1.msra.mxu0 %v71
    %108 = vmatprep.subr.mxu0 0.0
    %109 = vmatpush1.msra.mxu0 %v72
    %110 = vmatprep.subr.mxu0 0.0
    %111 = vmatpush1.msra.mxu0 %v73
    %112 = vmatprep.subr.mxu0 0.0
    %113 = vmatpush1.msra.mxu0 %v74
    %114 = vmatprep.subr.mxu0 0.0
    %115 = vmatpush1.msra.mxu0 0.0
    %116 = vmatprep.subr.mxu0 0.0
    %117 = vmatpush1.msra.mxu0 0.0
    %118 = vmatprep.subr.mxu0 0.0
    %119 = vmatpush1.msra.mxu0 0.0
    %120 = vmatprep.subr.mxu0 0.0
    %121 = vmatpush1.msra.mxu0 0.0
    %122 = vmatprep.subr.mxu0 0.0
    %123 = vmatpush1.msra.mxu0 0.0
    %124 = vmatprep.subr.mxu0 0.0
    %125 = vmatpush1.msra.mxu0 0.0
    %126 = vmatprep.subr.mxu0 0.0
    %127 = vmatpush1.msra.mxu0 0.0
    %128 = vmatprep.subr.mxu0 0.0
    %129 = vmatpush1.msra.mxu0 0.0
    %130 = vmatprep.subr.mxu0 0.0
    %131 = vmatpush1.msra.mxu0 0.0
    %132 = vmatprep.subr.mxu0 0.0
    %133 = vmatpush1.msra.mxu0 0.0
    %134 = vmatprep.subr.mxu0 0.0
    %135 = vmatpush1.msra.mxu0 0.0
    %136 = vmatprep.subr.mxu0 0.0
    %137 = vmatpush1.msra.mxu0 0.0
    %138 = vmatprep.subr.mxu0 0.0
    %139 = vmatpush1.msra.mxu0 0.0
    %140 = vmatprep.subr.mxu0 0.0
    %141 = vmatpush1.msra.mxu0 0.0
    %142 = vmatprep.subr.mxu0 0.0
    %143 = vmatpush1.msra.mxu0 0.0
    %144 = vmatprep.subr.mxu0 0.0
    %145 = vmatpush1.msra.mxu0 0.0
    %146 = vmatprep.mubr.f32.mxu0 0.0
    %147 = vmatmul.mubr.f32.gmra.mrb[0].mxu0 %v43
    %v148 = vpop.f32.mrb[0].mxu0
    %v149 = vadd.f32 %v80, %v148
    %v150 = vpop.f32.mrb[0].mxu0
    %151 = vmatprep.mubr.f32.mxu0 0.0
    %152 = vmatmul.mubr.f32.gmra.mrb[0].mxu0 %v44
    %v153 = vpop.f32.mrb[0].mxu0
    %v154 = vadd.f32 %v80, %v153
    %v155 = vpop.f32.mrb[0].mxu0
    %156 = vmatprep.mubr.f32.mxu0 0.0
    %157 = vmatmul.mubr.f32.gmra.mrb[0].mxu0 %v45
    %v158 = vpop.f32.mrb[0].mxu0
    %v159 = vadd.f32 %v80, %v158
    %v160 = vpop.f32.mrb[0].mxu0
    %161 = vmatprep.mubr.f32.mxu0 0.0
    %162 = vmatmul.mubr.f32.gmra.mrb[0].mxu0 %v46
    %v163 = vpop.f32.mrb[0].mxu0
    %v164 = vadd.f32 %v80, %v163
    %v165 = vpop.f32.mrb[0].mxu0
    %166 = vmatprep.mubr.f32.mxu0 0.0
    %167 = vmatmul.mubr.f32.gmra.mrb[0].mxu0 %v47
    %v168 = vpop.f32.mrb[0].mxu0
    %v169 = vadd.f32 %v80, %v168
    %v170 = vpop.f32.mrb[0].mxu0
    %171 = vmatprep.mubr.f32.mxu0 0.0
    %172 = vmatmul.mubr.f32.gmra.mrb[0].mxu0 %v48
    %v173 = vpop.f32.mrb[0].mxu0
    %v174 = vadd.f32 %v80, %v173
    %v175 = vpop.f32.mrb[0].mxu0
    %176 = vmatprep.mubr.f32.mxu0 0.0
    %177 = vmatmul.mubr.f32.gmra.mrb[0].mxu0 %v49
    %v178 = vpop.f32.mrb[0].mxu0
    %v179 = vadd.f32 %v80, %v178
    %v180 = vpop.f32.mrb[0].mxu0
    %181 = vmatprep.mubr.f32.mxu0 0.0
    %182 = vmatmul.mubr.f32.gmra.mrb[0].mxu0 %v50
    %v183 = vpop.f32.mrb[0].mxu0
    %v184 = vadd.f32 %v80, %v183
    %v185 = vpop.f32.mrb[0].mxu0
    %186 = vmatprep.mubr.f32.mxu0 0.0
    %187 = vmatmul.mubr.f32.gmra.mrb[0].mxu0 %v51
    %v188 = vpop.f32.mrb[0].mxu0
    %v189 = vadd.f32 %v80, %v188
    %v190 = vpop.f32.mrb[0].mxu0
    %191 = vmatprep.mubr.f32.mxu0 0.0
    %192 = vmatmul.mubr.f32.gmra.mrb[0].mxu0 %v52
    %v193 = vpop.f32.mrb[0].mxu0
    %v194 = vadd.f32 %v80, %v193
    %v195 = vpop.f32.mrb[0].mxu0
    %196 = vmatprep.mubr.f32.mxu0 0.0
    %197 = vmatmul.mubr.f32.gmra.mrb[0].mxu0 %v53
    %v198 = vpop.f32.mrb[0].mxu0
    %v199 = vadd.f32 %v80, %v198
    %v200 = vpop.f32.mrb[0].mxu0
    %201 = vmatprep.mubr.f32.mxu0 0.0
    %202 = vmatmul.mubr.f32.gmra.mrb[0].mxu0 %v54
    %v203 = vpop.f32.mrb[0].mxu0
    %v204 = vadd.f32 %v80, %v203
    %v205 = vpop.f32.mrb[0].mxu0
    %206 = vmatprep.mubr.f32.mxu0 0.0
    %207 = vmatmul.mubr.f32.gmra.mrb[0].mxu0 %v55
    %v208 = vpop.f32.mrb[0].mxu0
    %v209 = vadd.f32 %v80, %v208
    %v210 = vpop.f32.mrb[0].mxu0
    %211 = vmatprep.mubr.f32.mxu0 0.0
    %212 = vmatmul.mubr.f32.gmra.mrb[0].mxu0 %v56
    %v213 = vpop.f32.mrb[0].mxu0
    %v214 = vadd.f32 %v80, %v213
    %v215 = vpop.f32.mrb[0].mxu0
    %216 = vmatprep.mubr.f32.mxu0 0.0
    %217 = vmatmul.mubr.f32.gmra.mrb[0].mxu0 %v57
    %v218 = vpop.f32.mrb[0].mxu0
    %v219 = vadd.f32 %v80, %v218
    %v220 = vpop.f32.mrb[0].mxu0
    %221 = vmatprep.mubr.f32.mxu0 0.0
    %222 = vmatmul.mubr.f32.gmra.mrb[0].mxu0 %v58
    %v223 = vpop.f32.mrb[0].mxu0
    %v224 = vadd.f32 %v80, %v223
    %v225 = vpop.f32.mrb[0].mxu0
    %226 = vdwg.mxu0
    %227 = vst [vmem:[#allocation7] sm:$0xff] %v149
    %228 = vst [vmem:[#allocation7 + $0x8] sm:$0xff] %v154
    %229 = vst [vmem:[#allocation7 + $0x10] sm:$0xff] %v159
    %230 = vst [vmem:[#allocation7 + $0x18] sm:$0xff] %v164
    %231 = vst [vmem:[#allocation7 + $0x20] sm:$0xff] %v169
    %232 = vst [vmem:[#allocation7 + $0x28] sm:$0xff] %v174
    %233 = vst [vmem:[#allocation7 + $0x30] sm:$0xff] %v179
    %234 = vst [vmem:[#allocation7 + $0x38] sm:$0xff] %v184
    %235 = vst [vmem:[#allocation7 + $0x40] sm:$0xff] %v189
    %236 = vst [vmem:[#allocation7 + $0x48] sm:$0xff] %v194
    %237 = vst [vmem:[#allocation7 + $0x50] sm:$0xff] %v199
    %238 = vst [vmem:[#allocation7 + $0x58] sm:$0xff] %v204
    %239 = vst [vmem:[#allocation7 + $0x60] sm:$0xff] %v209
    %240 = vst [vmem:[#allocation7 + $0x68] sm:$0xff] %v214
    %241 = vst [vmem:[#allocation7 + $0x70] sm:$0xff] %v219
    %242 = vst [vmem:[#allocation7 + $0x78] sm:$0xff] %v224
    // Predicated region
    $region22: #{tpu_custom_call.1} parent=1 // pred_check
      _
    $region23: #{tpu_custom_call.1} parent=1 // pred_check_branch
      %244 = sbr.rel (0) target = $region25
    $region24: #{tpu_custom_call.1} parent=1 // pred_region
      %s246 = ssub.s32 2048, 2048
      %247 = vsyncadd [#allocation4], %s246
      %s248 = sshll.u32 [#allocation7], 4
      %s249 = int_to_ptr.vmem [resolvable:$true] %s248
      %254 = dma.vmem_to_hbm [thread:$0]  %s249, 2048, %s3, [#allocation4], 128, 128, 8
    $region25: #{tpu_custom_call.1} parent=1 // pred_fallthru
      _
    // Predicated region
    $region26: #{tpu_custom_call.1} parent=1 // pred_check
      _
    $region27: #{tpu_custom_call.1} parent=1 // pred_check_branch
      %256 = sbr.rel (0) target = $region29
    $region28: #{tpu_custom_call.1} parent=1 // pred_region
      %257 = dma.done [#allocation4], 2048
    $region29: #{tpu_custom_call.1} parent=1 // pred_fallthru
      _
    %258 = vsyncpa [#allocation3], 1
    %259 = vsyncpa [#allocation6], 1
    %260 = vsyncpa [#allocation4], 1

</llo_original>
